<compile_context>
chip_gen: v7x
topology: tpu7x:2x2x1
jax: 0.10.0
libtpu: 0.0.40
codegen_flags: <defaults>
</compile_context>

<pallas_src>
import jax
import jax.numpy as jnp
from jax.experimental import pallas as pl
from jax.experimental.pallas import tpu as pltpu


# ----------------------------- tuning constants -----------------------------
_TARGET_TILE_BYTES = 8 * 1024 * 1024    # per-input-tile bytes (review: 4-8 MiB)
_VMEM_LIMIT_BYTES = 48 * 1024 * 1024    # raised from 32 MiB; < 64 MiB v7x VMEM
_VMEM_TILE_BUDGET = 40 * 1024 * 1024    # headroom under the limit for scratch
_SPLIT_MIN_BYTES = 4 * 1024 * 1024      # force >=2 grid steps above this (v7x)
_LANE = 128
_F32_VMEM_TILE = 8 * 128 * 4            # one (8,128) f32 VMEM tile = 4 KiB
_MAX_COLUMN_TABLE = 128 * 1024          # max C*H*W for the per-column 4D path


# ---------------------------------------------------------------------------
# Kernel: one fused multiply-add per tile, computed in f32 regardless of the
# I/O dtype.  scale/shift broadcast against the x tile: (tm,1) for the
# per-row path, (1,L) for the per-column path.
# ---------------------------------------------------------------------------
def _affine_kernel(scale_ref, shift_ref, x_ref, o_ref):
    x = x_ref[...].astype(jnp.float32)
    o_ref[...] = (x * scale_ref[...] + shift_ref[...]).astype(o_ref.dtype)


def _sublane_align(itemsize):
    # f32 -> 8, bf16 -> 16, int8/fp8 -> 32 (sub-32-bit dtypes pack sublanes).
    return max(8, 32 // max(1, int(itemsize)))


def _choose_tm(M, L, itemsize, per_row):
    """Row-tile size: byte-based (~_TARGET_TILE_BYTES of input), VMEM-budgeted,
    >=2 grid steps for tensors above _SPLIT_MIN_BYTES, exact divisor of M when
    one exists in [tm/2, tm] (otherwise Pallas handles the ragged tail)."""
    sub = _sublane_align(itemsize)
    row_in = max(1, L * itemsize)
    total = M * row_in

    # Double-buffered VMEM cost per tile row: x + out tiles, plus the
    # sublane-padded (tm,1) f32 scale/shift buffers on the per-row path.
    row_vmem = 4 * row_in + (2048 if per_row else 0)
    # Per-column path: resident (1,L) f32 scale/shift buffers (lane-tiled).
    fixed_vmem = 0 if per_row else 4 * pl.cdiv(L, _LANE) * _F32_VMEM_TILE
    budget = max(_VMEM_TILE_BUDGET - fixed_vmem, sub * row_vmem)

    cap = min(_TARGET_TILE_BYTES // row_in, budget // row_vmem)
    cap = max(sub, (cap // sub) * sub)

    if M <= cap and (total <= _SPLIT_MIN_BYTES or M < 2 * sub):
        return M                                  # single block

    want = cap
    if total > _SPLIT_MIN_BYTES and M >= 2 * sub:
        # Guarantee >=2 grid steps so v7x can shard across its 2 TensorCores.
        half = max(sub, ((M // 2) // sub) * sub)
        want = min(want, half)

    # Prefer an exact divisor (no ragged tail, even 2-TC split), but never let
    # the search shrink the tile below ~half the cap.
    t = want
    floor_t = max(sub, want // 2)
    while t >= floor_t:
        if M % t == 0:
            return t
        t -= sub
    return want                                   # ragged tail: Pallas masks it


def _affine_pallas(x2d, scale2d, shift2d, *, per_row):
    """out = x2d * scale + shift, tiled along rows (native dtype preserved).

    per_row=True : scale/shift have shape (M, 1).
    per_row=False: scale/shift have shape (1, L).
    """
    M, L = x2d.shape
    itemsize = jnp.dtype(x2d.dtype).itemsize
    tm = _choose_tm(M, L, itemsize, per_row)
    grid = (pl.cdiv(M, tm),)                      # ragged last block allowed

    if per_row:
        s_spec = pl.BlockSpec((tm, 1), lambda i: (i, 0))
    else:
        s_spec = pl.BlockSpec((1, L), lambda i: (0, 0))   # loaded once, reused
    x_spec = pl.BlockSpec((tm, L), lambda i: (i, 0))

    return pl.pallas_call(
        _affine_kernel,
        out_shape=jax.ShapeDtypeStruct((M, L), x2d.dtype),
        grid_spec=pltpu.PrefetchScalarGridSpec(
            num_scalar_prefetch=0,
            grid=grid,
            in_specs=[s_spec, s_spec, x_spec],
            out_specs=x_spec,
        ),
        compiler_params=pltpu.CompilerParams(
            dimension_semantics=("parallel",),
            vmem_limit_bytes=_VMEM_LIMIT_BYTES,
        ),
    )(scale2d, shift2d, x2d)


def _scale_shift(gamma, beta, alpha, delta, running_mean, running_var):
    """Fold the TBN formula into per-channel scale/shift (C elements, cheap).
    Scalar, (1,) or per-channel (C,) parameters all broadcast correctly."""
    g = jnp.asarray(gamma, jnp.float32)
    b = jnp.asarray(beta, jnp.float32)
    a = jnp.asarray(alpha, jnp.float32)
    d = jnp.asarray(delta, jnp.float32)
    rm = jnp.asarray(running_mean, jnp.float32)
    rv = jnp.asarray(running_var, jnp.float32)
    denom = jnp.sqrt(rv) * d + (1.0 - d)
    scale = g / denom
    shift = b - scale * a * rm
    scale = jnp.broadcast_to(scale, rv.shape).reshape(-1)
    shift = jnp.broadcast_to(shift, rv.shape).reshape(-1)
    return scale, shift


def trailing_batch_norm(x, gamma, beta, alpha, delta,
                        running_mean, running_var):
    """Matches TrailingBatchNorm.forward (inference path), dtype-preserving.

    4D input is NCHW, normalized per channel.  2D input (batch, features) is
    normalized per feature (torch broadcast of the (C,) running stats).
    """
    x = jnp.asarray(x)                            # keep native dtype (bf16 stays bf16)
    scale, shift = _scale_shift(gamma, beta, alpha, delta,
                                running_mean, running_var)          # (C,) f32

    if x.ndim == 4:
        N, C, H, W = x.shape
        HW = H * W
        if HW < 2 * _LANE and C * HW <= _MAX_COLUMN_TABLE:
            # Small-spatial stages (7x7 / 14x14): lane-dense per-sample view
            # (N, C*H*W) with a per-column scale table (scale repeated H*W x).
            x2d = x.reshape(N, C * HW)
            out2d = _affine_pallas(
                x2d,
                jnp.repeat(scale, HW).reshape(1, C * HW),
                jnp.repeat(shift, HW).reshape(1, C * HW),
                per_row=False)
        else:
            # Large spatial: (N*C, H*W) view, per-row scale (row r -> channel r%C).
            x2d = x.reshape(N * C, HW)
            out2d = _affine_pallas(
                x2d,
                jnp.tile(scale, N).reshape(N * C, 1),
                jnp.tile(shift, N).reshape(N * C, 1),
                per_row=True)
        return out2d.reshape(N, C, H, W)

    if x.ndim == 2:
        M, C = x.shape
        return _affine_pallas(x, scale.reshape(1, C), shift.reshape(1, C),
                              per_row=False)

    # TODO(synk): torch's batchnorm_forward only broadcasts cleanly for 2D/4D;
    # other ranks are not supported here.
    raise NotImplementedError(
        "TrailingBatchNorm Pallas port supports 4D NCHW or 2D (batch, features).")


# TODO(synk): the PyTorch module also updates temp_running_mean/variance as a
# training-time side effect when x.requires_grad; this stateful EMA update is
# not part of the inference forward output and is omitted here.


if __name__ == "__main__":
    key = jax.random.PRNGKey(0)
    k1, k2, k3, k4, k5, k6, k7, k8 = jax.random.split(key, 8)

    gamma = jnp.array([1.3], dtype=jnp.float32)
    beta = jnp.array([-0.4], dtype=jnp.float32)
    alpha = jnp.array([0.2], dtype=jnp.float32)
    delta = jnp.array([0.2], dtype=jnp.float32)

    def ref_4d(xin, rm, rv):
        xf = xin.astype(jnp.float32)
        denom = jnp.sqrt(rv).reshape(1, -1, 1, 1) * delta[0] + (1.0 - delta[0])
        return gamma[0] * ((xf - rm.reshape(1, -1, 1, 1) * alpha[0]) / denom) + beta[0]

    # 1) Small f32 NCHW (per-row path, H*W = 256).
    N, C, H, W = 2, 4, 16, 16
    x = jax.random.normal(k1, (N, C, H, W), dtype=jnp.float32)
    rm = jax.random.normal(k2, (C,), dtype=jnp.float32)
    rv = jax.random.uniform(k3, (C,), dtype=jnp.float32, minval=0.5, maxval=2.0)
    out = jax.block_until_ready(
        trailing_batch_norm(x, gamma, beta, alpha, delta, rm, rv))
    assert out.shape == x.shape and out.dtype == x.dtype
    assert jnp.allclose(out, ref_4d(x, rm, rv), atol=1e-5, rtol=1e-5)

    # 2) bf16 NCHW, small spatial (per-column lane-dense path, H*W = 49).
    C2 = 8
    xb = jax.random.normal(k4, (2, C2, 7, 7), dtype=jnp.float32).astype(jnp.bfloat16)
    rm2 = jax.random.normal(k5, (C2,), dtype=jnp.float32)
    rv2 = jax.random.uniform(k6, (C2,), dtype=jnp.float32, minval=0.5, maxval=2.0)
    outb = jax.block_until_ready(
        trailing_batch_norm(xb, gamma, beta, alpha, delta, rm2, rv2))
    assert outb.dtype == jnp.bfloat16
    assert jnp.allclose(outb.astype(jnp.float32), ref_4d(xb, rm2, rv2),
                        atol=5e-2, rtol=5e-2)

    # 3) Multi-step grid with a ragged tail (f32, >4 MiB, M=280 rows -> 3 tiles).
    C3 = 35
    x3 = jax.random.normal(k7, (8, C3, 64, 64), dtype=jnp.float32)
    rm3 = jax.random.normal(k8, (C3,), dtype=jnp.float32)
    rv3 = jax.random.uniform(k2, (C3,), dtype=jnp.float32, minval=0.5, maxval=2.0)
    out3 = jax.block_until_ready(
        trailing_batch_norm(x3, gamma, beta, alpha, delta, rm3, rv3))
    assert jnp.allclose(out3, ref_4d(x3, rm3, rv3), atol=1e-5, rtol=1e-5)

    # 4) Non-4D branch: 2D (batch, features) per-feature normalization.
    x4 = jax.random.normal(k3, (8, 32), dtype=jnp.float32)
    rm4 = jax.random.normal(k5, (32,), dtype=jnp.float32)
    rv4 = jax.random.uniform(k6, (32,), dtype=jnp.float32, minval=0.5, maxval=2.0)
    out4 = jax.block_until_ready(
        trailing_batch_norm(x4, gamma, beta, alpha, delta, rm4, rv4))
    ref4 = gamma[0] * ((x4 - rm4 * alpha[0]) /
                       (jnp.sqrt(rv4) * delta[0] + (1.0 - delta[0]))) + beta[0]
    assert jnp.allclose(out4, ref4, atol=1e-5, rtol=1e-5)

    print("KERNEL_OK")
</pallas_src>

<mosaic_0001>
module attributes {stable_mosaic.version = 11 : i64} {
  func.func @_affine_kernel(%arg0: i32, %arg1: memref<8x1xf32, #tpu.memory_space<vmem>>, %arg2: memref<8x1xf32, #tpu.memory_space<vmem>>, %arg3: memref<8x256xf32, #tpu.memory_space<vmem>>, %arg4: memref<8x256xf32, #tpu.memory_space<vmem>>) attributes {dimension_semantics = [#tpu.dimension_semantics<parallel>], iteration_bounds = array<i64: 1>, scalar_prefetch = 0 : i64, scratch_operands = 0 : i64, tpu.core_type = #tpu.core_type<tc>, window_params = [{transform_indices = @transform_0, window_bounds = array<i64: 8, 1>}, {transform_indices = @transform_1, window_bounds = array<i64: 8, 1>}, {transform_indices = @transform_2, window_bounds = array<i64: 8, 256>}, {transform_indices = @transform_3, window_bounds = array<i64: 8, 256>}]} {
    %c0 = arith.constant 0 : index
    %c0_0 = arith.constant 0 : index
    %0 = vector.load %arg3[%c0, %c0_0] : memref<8x256xf32, #tpu.memory_space<vmem>>, vector<8x256xf32>
    %c0_1 = arith.constant 0 : index
    %c0_2 = arith.constant 0 : index
    %1 = vector.load %arg1[%c0_1, %c0_2] : memref<8x1xf32, #tpu.memory_space<vmem>>, vector<8x1xf32>
    %2 = vector.broadcast %1 : vector<8x1xf32> to vector<8x256xf32>
    %3 = arith.mulf %0, %2 : vector<8x256xf32>
    %c0_3 = arith.constant 0 : index
    %c0_4 = arith.constant 0 : index
    %4 = vector.load %arg2[%c0_3, %c0_4] : memref<8x1xf32, #tpu.memory_space<vmem>>, vector<8x1xf32>
    %5 = vector.broadcast %4 : vector<8x1xf32> to vector<8x256xf32>
    %6 = arith.addf %3, %5 : vector<8x256xf32>
    %c0_5 = arith.constant 0 : index
    %c0_6 = arith.constant 0 : index
    %7 = vector.load %arg4[%c0_5, %c0_6] : memref<8x256xf32, #tpu.memory_space<vmem>>, vector<8x256xf32>
    tpu.vector_store %arg4[%c0_5, %c0_6], %6 {strides = array<i32>} : memref<8x256xf32, #tpu.memory_space<vmem>>, vector<8x256xf32>,
    return
  }
  func.func @transform_0(%arg0: i32) -> (i32, i32) {
    %c0_i32 = arith.constant 0 : i32
    %c0_i32_0 = arith.constant 0 : i32
    return %arg0, %c0_i32 : i32, i32
  }
  func.func @transform_1(%arg0: i32) -> (i32, i32) {
    %c0_i32 = arith.constant 0 : i32
    %c0_i32_0 = arith.constant 0 : i32
    return %arg0, %c0_i32 : i32, i32
  }
  func.func @transform_2(%arg0: i32) -> (i32, i32) {
    %c0_i32 = arith.constant 0 : i32
    %c0_i32_0 = arith.constant 0 : i32
    return %arg0, %c0_i32 : i32, i32
  }
  func.func @transform_3(%arg0: i32) -> (i32, i32) {
    %c0_i32 = arith.constant 0 : i32
    %c0_i32_0 = arith.constant 0 : i32
    return %arg0, %c0_i32 : i32, i32
  }
}

</mosaic_0001>

<llo_original>
// kernel: tpu_custom_call.1
$region0: #{tpu_custom_call.1}
  #allocation0 [shape = 'u32[]', space=smem, size = 0x4, offset = 0x4, fixed_abs, tag = 'smem constant byte address 0x4 - core index']
  #allocation1 [shape = 'u32[144,128]{1,0:T(1,128)}', space=vmem, size = 0x12000, scoped, tag = 'internal scratch']
  %s0 = inlined_call_operand.vmem [shape: f32[8,1], index: 0, kind: input, shape index: {}]
  %s1 = inlined_call_operand.vmem [shape: f32[8,1], index: 1, kind: input, shape index: {}]
  %s2 = inlined_call_operand.vmem [shape: f32[8,256], index: 2, kind: input, shape index: {}]
  %s3 = inlined_call_operand.hbm [shape: f32[8,256], index: 3, kind: output, shape index: {}]
  %s4 = sld [smem:[#allocation0]]
  $region22: #{tpu_custom_call.1} parent=0
    _
  %s6 = ssub.s32 1, %s4
  %s7 = scalar_select 0, %s6, %s4
  $region1: #{tpu_custom_call.1} parent=0
    #allocation2 [shape = 'u8[8192]{0}', space=vmem, size = 0x2000, scoped, tag = 'output window, operand 0, single buffered']
    #allocation3 [shape = 's32[1]{0}', space=sflag, size = 0x4, scoped, tag = 'scoped memory for tpu_custom_call.1']
    %8 = vsyncpa [#allocation3], 0
    // Predicated region
    $region2: #{tpu_custom_call.1} parent=1 // pred_check
      _
    $region3: #{tpu_custom_call.1} parent=1 // pred_check_branch
      %10 = sbr.rel (0) target = $region5
    $region4: #{tpu_custom_call.1} parent=1 // pred_region
      _
    $region5: #{tpu_custom_call.1} parent=1 // pred_fallthru
      _
    // Predicated region
    $region6: #{tpu_custom_call.1} parent=1 // pred_check
      _
    $region7: #{tpu_custom_call.1} parent=1 // pred_check_branch
      %12 = sbr.rel (0) target = $region9
    $region8: #{tpu_custom_call.1} parent=1 // pred_region
      _
    $region9: #{tpu_custom_call.1} parent=1 // pred_fallthru
      _
    // Predicated region
    $region10: #{tpu_custom_call.1} parent=1 // pred_check
      _
    $region11: #{tpu_custom_call.1} parent=1 // pred_check_branch
      %14 = sbr.rel (0) target = $region13
    $region12: #{tpu_custom_call.1} parent=1 // pred_region
      _
    $region13: #{tpu_custom_call.1} parent=1 // pred_fallthru
      _
    %v15 = vld [vmem:[%s2] sm:$0xff]
    %v16 = vld [vmem:[%s2 + $0x8] sm:$0xff]
    %v17 = vld [vmem:[%s0] sm:$0xff]
    %19 = vset.pattern.permute.xlu0 0
    %20 = vperm.xlu0 %19, %v17
    %v21 = vpop.permute.xlu0 %20
    %v23 = vmul.f32 %v15, %v21
    %v24 = vmul.f32 %v16, %v21
    %v25 = vld [vmem:[%s1] sm:$0xff]
    %27 = vset.pattern.permute.xlu0 0
    %28 = vperm.xlu0 %27, %v25
    %v29 = vpop.permute.xlu0 %28
    %v31 = vadd.f32 %v23, %v29
    %v32 = vadd.f32 %v24, %v29
    %33 = vst [vmem:[#allocation2] sm:$0xff] %v31
    %34 = vst [vmem:[#allocation2 + $0x8] sm:$0xff] %v32
    // Predicated region
    $region14: #{tpu_custom_call.1} parent=1 // pred_check
      _
    $region15: #{tpu_custom_call.1} parent=1 // pred_check_branch
      %36 = sbr.rel (0) target = $region17
    $region16: #{tpu_custom_call.1} parent=1 // pred_region
      %s38 = ssub.s32 256, 256
      %39 = vsyncadd [#allocation3], %s38
      %s41 = sshll.u32 [#allocation2], 4
      %s42 = int_to_ptr.vmem [resolvable:$true] %s41
      %44 = dma.vmem_to_hbm [thread:$0]  %s42, 256, %s3, [#allocation3]
    $region17: #{tpu_custom_call.1} parent=1 // pred_fallthru
      _
    // Predicated region
    $region18: #{tpu_custom_call.1} parent=1 // pred_check
      _
    $region19: #{tpu_custom_call.1} parent=1 // pred_check_branch
      %46 = sbr.rel (0) target = $region21
    $region20: #{tpu_custom_call.1} parent=1 // pred_region
      %47 = dma.done [#allocation3], 256
    $region21: #{tpu_custom_call.1} parent=1 // pred_fallthru
      _
    %48 = vsyncpa [#allocation3], 1

</llo_original>
